<compile_context>
chip_gen: v7x
topology: tpu7x:2x2x1
jax: 0.10.0
libtpu: 0.0.40
codegen_flags: <defaults>
</compile_context>

<pallas_src>
import functools

import jax
import jax.numpy as jnp
from jax import lax
from jax.experimental import pallas as pl
from jax.experimental.pallas import tpu as pltpu


def _rnn_kernel(x2d_ref, wih_ref, whh_ref, b_ref, bfc_ref, wfc_ref,
                y_ref, h_ref, *, seq_len, batch, max_iter):
    """batch here is the padded batch (multiple of 8 sublanes)."""
    Np = batch
    H = whh_ref.shape[0]

    whh = whh_ref[...]                                     # (H, H) — one vreg, stays resident
    b = jnp.broadcast_to(b_ref[...], (Np, H))              # hoisted: b_ih + b_hh, pre-summed

    # ---- hoisted input projection, kept entirely in vregs (no VMEM scratch) ----
    # U[t*Np:(t+1)*Np, :] = x_t @ W_ih^T + (b_ih + b_hh)
    u = (jnp.dot(x2d_ref[...], wih_ref[...],
                 preferred_element_type=jnp.float32)
         + b_ref[...])                                     # (L*Np, H)

    # ---- encoder recurrence: only  h = tanh(U[t] + h @ W_hh)  on the serial chain ----
    # Static Python loop -> static, sublane-aligned row slices of the vreg-resident U.
    h = jnp.zeros((Np, H), jnp.float32)
    for t in range(seq_len):
        u_t = u[t * Np:(t + 1) * Np, :]                    # static slice, offset % 8 == 0
        h = jnp.tanh(u_t + jnp.dot(h, whh, preferred_element_type=jnp.float32))

    # ---- decoder: fc is OFF the dependent chain ----
    # Per step only  h = tanh(b + h @ W_hh)  (decoder input is exactly zero, so x@W_ih == 0).
    hs = [h]                                               # y_0 comes from the encoder-final h
    for _ in range(max_iter - 1):
        h = jnp.tanh(b + jnp.dot(h, whh, preferred_element_type=jnp.float32))
        hs.append(h)

    # One batched fc matmul for all max_iter outputs + single dense store.
    hcat = jnp.concatenate(hs, axis=0)                     # (max_iter*Np, H)
    y = (jnp.dot(hcat, wfc_ref[...], preferred_element_type=jnp.float32)
         + bfc_ref[...])
    y_ref[...] = jnp.maximum(y, 0.0).astype(y_ref.dtype)   # (max_iter*Np, in)
    h_ref[...] = h.astype(h_ref.dtype)                     # state of the last output


def many_to_many_rnn(x, params, *, max_iter=4):
    """x: [L, N, input_size] float32. Returns (outputs [max_iter, N, input_size], h [N, hidden])."""
    L, N, input_size = x.shape
    H = params["whh_t"].shape[0]

    # --- one-time wrapper-side prep (plain XLA, off the serial chain) ---
    SUB = 8                                                 # sublane quantum
    Np = ((N + SUB - 1) // SUB) * SUB                       # pad batch to multiple of 8
    if Np != N:
        x = jnp.pad(x, ((0, 0), (0, Np - N), (0, 0)))       # zero rows ride along for free
    x2d = x.reshape(L * Np, input_size)                     # free row-major view
    b = params["bih"] + params["bhh"]                       # pre-summed recurrent bias (1, H)

    kernel = functools.partial(_rnn_kernel, seq_len=L, batch=Np, max_iter=max_iter)
    vmem = pl.BlockSpec(memory_space=pltpu.MemorySpace.VMEM)

    out_shapes = (
        jax.ShapeDtypeStruct((max_iter * Np, input_size), jnp.float32),
        jax.ShapeDtypeStruct((Np, H), jnp.float32),
    )

    # Scheduling hygiene: accurate cost estimate (tiny, latency-bound kernel).
    flops = (2 * L * Np * input_size * H                      # hoisted input projection
             + 2 * (L + max_iter - 1) * Np * H * H            # recurrent matmuls
             + 2 * max_iter * Np * H * input_size)            # batched fc
    transcendentals = (L + max_iter - 1) * Np * H             # tanh
    bytes_accessed = 4 * (L * Np * input_size + input_size * H + H * H + H
                          + input_size + H * input_size
                          + max_iter * Np * input_size + Np * H)

    y2d, h = pl.pallas_call(
        kernel,
        out_shape=out_shapes,
        in_specs=[vmem] * 6,
        out_specs=(vmem, vmem),
        cost_estimate=pl.CostEstimate(
            flops=flops, transcendentals=transcendentals,
            bytes_accessed=bytes_accessed),
    )(x2d, params["wih_t"], params["whh_t"], b, params["bfc"], params["wfc_t"])

    outputs = y2d.reshape(max_iter, Np, input_size)[:, :N, :]
    return outputs, h[:N, :]


def init_params(key, input_size, hidden_size):
    """Deterministic init matching PyTorch default ranges (uniform ±1/sqrt(hidden))."""
    k = 1.0 / jnp.sqrt(jnp.float32(hidden_size))
    keys = jax.random.split(key, 6)
    u = lambda kk, shape: jax.random.uniform(kk, shape, jnp.float32, -k, k)
    # Stored transposed: [in_features, out_features].
    return {
        "wih_t": u(keys[0], (input_size, hidden_size)),   # W_ih^T
        "whh_t": u(keys[1], (hidden_size, hidden_size)),  # W_hh^T
        "bih":   u(keys[2], (1, hidden_size)),
        "bhh":   u(keys[3], (1, hidden_size)),
        "wfc_t": u(keys[4], (hidden_size, input_size)),   # W_fc^T
        "bfc":   u(keys[5], (1, input_size)),
    }


def _reference(x, p, max_iter):
    """Pure-JAX reference of the PyTorch forward (break_value=None path)."""
    L = x.shape[0]
    h = jnp.zeros((x.shape[1], p["whh_t"].shape[0]), jnp.float32)
    for t in range(L):
        h = jnp.tanh(x[t] @ p["wih_t"] + p["bih"] + h @ p["whh_t"] + p["bhh"])
    outs = []
    y = jnp.maximum(h @ p["wfc_t"] + p["bfc"], 0.0)
    outs.append(y)
    for _ in range(max_iter - 1):
        h = jnp.tanh(p["bih"] + h @ p["whh_t"] + p["bhh"])   # zero decoder input
        y = jnp.maximum(h @ p["wfc_t"] + p["bfc"], 0.0)
        outs.append(y)
    return jnp.stack(outs), h


if __name__ == "__main__":
    L, N, INPUT_SIZE, HIDDEN_SIZE, MAX_ITER = 8, 2, 16, 32, 4

    root = jax.random.PRNGKey(0)
    kx, kp = jax.random.split(root)
    x = jax.random.normal(kx, (L, N, INPUT_SIZE), jnp.float32)
    params = init_params(kp, INPUT_SIZE, HIDDEN_SIZE)

    outputs, h = many_to_many_rnn(x, params, max_iter=MAX_ITER)
    outputs = jax.block_until_ready(outputs)
    h = jax.block_until_ready(h)

    ref_out, ref_h = _reference(x, params, MAX_ITER)
    assert outputs.shape == (MAX_ITER, N, INPUT_SIZE)
    assert h.shape == (N, HIDDEN_SIZE)
    assert jnp.allclose(outputs, ref_out, atol=1e-5, rtol=1e-5)
    assert jnp.allclose(h, ref_h, atol=1e-5, rtol=1e-5)

    print("KERNEL_OK")
</pallas_src>

<mosaic_0001>
module attributes {stable_mosaic.version = 11 : i64} {
  func.func @_rnn_kernel(%arg0: memref<64x16xf32, #tpu.memory_space<vmem>>, %arg1: memref<16x32xf32, #tpu.memory_space<vmem>>, %arg2: memref<32x32xf32, #tpu.memory_space<vmem>>, %arg3: memref<1x32xf32, #tpu.memory_space<vmem>>, %arg4: memref<1x16xf32, #tpu.memory_space<vmem>>, %arg5: memref<32x16xf32, #tpu.memory_space<vmem>>, %arg6: memref<32x16xf32, #tpu.memory_space<vmem>>, %arg7: memref<8x32xf32, #tpu.memory_space<vmem>>) attributes {dimension_semantics = [], scalar_prefetch = 0 : i64, scratch_operands = 0 : i64, tpu.core_type = #tpu.core_type<tc>} {
    %c0 = arith.constant 0 : index
    %c0_0 = arith.constant 0 : index
    %0 = vector.load %arg2[%c0, %c0_0] : memref<32x32xf32, #tpu.memory_space<vmem>>, vector<32x32xf32>
    %c0_1 = arith.constant 0 : index
    %c0_2 = arith.constant 0 : index
    %1 = vector.load %arg3[%c0_1, %c0_2] : memref<1x32xf32, #tpu.memory_space<vmem>>, vector<1x32xf32>
    %2 = vector.shape_cast %1 : vector<1x32xf32> to vector<1x32xf32>
    %3 = vector.broadcast %2 : vector<1x32xf32> to vector<8x32xf32>
    %c0_3 = arith.constant 0 : index
    %c0_4 = arith.constant 0 : index
    %4 = vector.load %arg0[%c0_3, %c0_4] : memref<64x16xf32, #tpu.memory_space<vmem>>, vector<64x16xf32>
    %c0_5 = arith.constant 0 : index
    %c0_6 = arith.constant 0 : index
    %5 = vector.load %arg1[%c0_5, %c0_6] : memref<16x32xf32, #tpu.memory_space<vmem>>, vector<16x32xf32>
    %cst = arith.constant dense<0.000000e+00> : vector<64x32xf32>
    %6 = tpu.matmul %4, %5, %cst {dimension_numbers = #tpu.dot_dimension_numbers<[1], [0], [0], [1], [0, 0, 1, 1], [], []>} : vector<64x16xf32>, vector<16x32xf32>, vector<64x32xf32> -> vector<64x32xf32>
    %c0_7 = arith.constant 0 : index
    %c0_8 = arith.constant 0 : index
    %7 = vector.load %arg3[%c0_7, %c0_8] : memref<1x32xf32, #tpu.memory_space<vmem>>, vector<1x32xf32>
    %8 = vector.broadcast %7 : vector<1x32xf32> to vector<64x32xf32>
    %9 = arith.addf %6, %8 : vector<64x32xf32>
    %cst_9 = arith.constant 0.000000e+00 : f32
    %10 = vector.broadcast %cst_9 : f32 to vector<8x32xf32>
    %11 = vector.extract_strided_slice %9 {offsets = [0, 0], sizes = [8, 32], strides = [1, 1]} : vector<64x32xf32> to vector<8x32xf32>
    %cst_10 = arith.constant dense<0.000000e+00> : vector<8x32xf32>
    %12 = tpu.matmul %10, %0, %cst_10 {dimension_numbers = #tpu.dot_dimension_numbers<[1], [0], [0], [1], [0, 0, 1, 1], [], []>} : vector<8x32xf32>, vector<32x32xf32>, vector<8x32xf32> -> vector<8x32xf32>
    %13 = arith.addf %11, %12 : vector<8x32xf32>
    %14 = math.tanh %13 : vector<8x32xf32>
    %15 = vector.extract_strided_slice %9 {offsets = [8, 0], sizes = [8, 32], strides = [1, 1]} : vector<64x32xf32> to vector<8x32xf32>
    %cst_11 = arith.constant dense<0.000000e+00> : vector<8x32xf32>
    %16 = tpu.matmul %14, %0, %cst_11 {dimension_numbers = #tpu.dot_dimension_numbers<[1], [0], [0], [1], [0, 0, 1, 1], [], []>} : vector<8x32xf32>, vector<32x32xf32>, vector<8x32xf32> -> vector<8x32xf32>
    %17 = arith.addf %15, %16 : vector<8x32xf32>
    %18 = math.tanh %17 : vector<8x32xf32>
    %19 = vector.extract_strided_slice %9 {offsets = [16, 0], sizes = [8, 32], strides = [1, 1]} : vector<64x32xf32> to vector<8x32xf32>
    %cst_12 = arith.constant dense<0.000000e+00> : vector<8x32xf32>
    %20 = tpu.matmul %18, %0, %cst_12 {dimension_numbers = #tpu.dot_dimension_numbers<[1], [0], [0], [1], [0, 0, 1, 1], [], []>} : vector<8x32xf32>, vector<32x32xf32>, vector<8x32xf32> -> vector<8x32xf32>
    %21 = arith.addf %19, %20 : vector<8x32xf32>
    %22 = math.tanh %21 : vector<8x32xf32>
    %23 = vector.extract_strided_slice %9 {offsets = [24, 0], sizes = [8, 32], strides = [1, 1]} : vector<64x32xf32> to vector<8x32xf32>
    %cst_13 = arith.constant dense<0.000000e+00> : vector<8x32xf32>
    %24 = tpu.matmul %22, %0, %cst_13 {dimension_numbers = #tpu.dot_dimension_numbers<[1], [0], [0], [1], [0, 0, 1, 1], [], []>} : vector<8x32xf32>, vector<32x32xf32>, vector<8x32xf32> -> vector<8x32xf32>
    %25 = arith.addf %23, %24 : vector<8x32xf32>
    %26 = math.tanh %25 : vector<8x32xf32>
    %27 = vector.extract_strided_slice %9 {offsets = [32, 0], sizes = [8, 32], strides = [1, 1]} : vector<64x32xf32> to vector<8x32xf32>
    %cst_14 = arith.constant dense<0.000000e+00> : vector<8x32xf32>
    %28 = tpu.matmul %26, %0, %cst_14 {dimension_numbers = #tpu.dot_dimension_numbers<[1], [0], [0], [1], [0, 0, 1, 1], [], []>} : vector<8x32xf32>, vector<32x32xf32>, vector<8x32xf32> -> vector<8x32xf32>
    %29 = arith.addf %27, %28 : vector<8x32xf32>
    %30 = math.tanh %29 : vector<8x32xf32>
    %31 = vector.extract_strided_slice %9 {offsets = [40, 0], sizes = [8, 32], strides = [1, 1]} : vector<64x32xf32> to vector<8x32xf32>
    %cst_15 = arith.constant dense<0.000000e+00> : vector<8x32xf32>
    %32 = tpu.matmul %30, %0, %cst_15 {dimension_numbers = #tpu.dot_dimension_numbers<[1], [0], [0], [1], [0, 0, 1, 1], [], []>} : vector<8x32xf32>, vector<32x32xf32>, vector<8x32xf32> -> vector<8x32xf32>
    %33 = arith.addf %31, %32 : vector<8x32xf32>
    %34 = math.tanh %33 : vector<8x32xf32>
    %35 = vector.extract_strided_slice %9 {offsets = [48, 0], sizes = [8, 32], strides = [1, 1]} : vector<64x32xf32> to vector<8x32xf32>
    %cst_16 = arith.constant dense<0.000000e+00> : vector<8x32xf32>
    %36 = tpu.matmul %34, %0, %cst_16 {dimension_numbers = #tpu.dot_dimension_numbers<[1], [0], [0], [1], [0, 0, 1, 1], [], []>} : vector<8x32xf32>, vector<32x32xf32>, vector<8x32xf32> -> vector<8x32xf32>
    %37 = arith.addf %35, %36 : vector<8x32xf32>
    %38 = math.tanh %37 : vector<8x32xf32>
    %39 = vector.extract_strided_slice %9 {offsets = [56, 0], sizes = [8, 32], strides = [1, 1]} : vector<64x32xf32> to vector<8x32xf32>
    %cst_17 = arith.constant dense<0.000000e+00> : vector<8x32xf32>
    %40 = tpu.matmul %38, %0, %cst_17 {dimension_numbers = #tpu.dot_dimension_numbers<[1], [0], [0], [1], [0, 0, 1, 1], [], []>} : vector<8x32xf32>, vector<32x32xf32>, vector<8x32xf32> -> vector<8x32xf32>
    %41 = arith.addf %39, %40 : vector<8x32xf32>
    %42 = math.tanh %41 : vector<8x32xf32>
    %cst_18 = arith.constant dense<0.000000e+00> : vector<8x32xf32>
    %43 = tpu.matmul %42, %0, %cst_18 {dimension_numbers = #tpu.dot_dimension_numbers<[1], [0], [0], [1], [0, 0, 1, 1], [], []>} : vector<8x32xf32>, vector<32x32xf32>, vector<8x32xf32> -> vector<8x32xf32>
    %44 = arith.addf %3, %43 : vector<8x32xf32>
    %45 = math.tanh %44 : vector<8x32xf32>
    %cst_19 = arith.constant dense<0.000000e+00> : vector<8x32xf32>
    %46 = tpu.matmul %45, %0, %cst_19 {dimension_numbers = #tpu.dot_dimension_numbers<[1], [0], [0], [1], [0, 0, 1, 1], [], []>} : vector<8x32xf32>, vector<32x32xf32>, vector<8x32xf32> -> vector<8x32xf32>
    %47 = arith.addf %3, %46 : vector<8x32xf32>
    %48 = math.tanh %47 : vector<8x32xf32>
    %cst_20 = arith.constant dense<0.000000e+00> : vector<8x32xf32>
    %49 = tpu.matmul %48, %0, %cst_20 {dimension_numbers = #tpu.dot_dimension_numbers<[1], [0], [0], [1], [0, 0, 1, 1], [], []>} : vector<8x32xf32>, vector<32x32xf32>, vector<8x32xf32> -> vector<8x32xf32>
    %50 = arith.addf %3, %49 : vector<8x32xf32>
    %51 = math.tanh %50 : vector<8x32xf32>
    %52 = tpu.concatenate %42, %45, %48, %51 in 0 : vector<8x32xf32>, vector<8x32xf32>, vector<8x32xf32>, vector<8x32xf32> -> vector<32x32xf32>
    %c0_21 = arith.constant 0 : index
    %c0_22 = arith.constant 0 : index
    %53 = vector.load %arg5[%c0_21, %c0_22] : memref<32x16xf32, #tpu.memory_space<vmem>>, vector<32x16xf32>
    %cst_23 = arith.constant dense<0.000000e+00> : vector<32x16xf32>
    %54 = tpu.matmul %52, %53, %cst_23 {dimension_numbers = #tpu.dot_dimension_numbers<[1], [0], [0], [1], [0, 0, 1, 1], [], []>} : vector<32x32xf32>, vector<32x16xf32>, vector<32x16xf32> -> vector<32x16xf32>
    %c0_24 = arith.constant 0 : index
    %c0_25 = arith.constant 0 : index
    %55 = vector.load %arg4[%c0_24, %c0_25] : memref<1x16xf32, #tpu.memory_space<vmem>>, vector<1x16xf32>
    %56 = vector.broadcast %55 : vector<1x16xf32> to vector<32x16xf32>
    %57 = arith.addf %54, %56 : vector<32x16xf32>
    %cst_26 = arith.constant 0.000000e+00 : f32
    %58 = vector.broadcast %cst_26 : f32 to vector<32x16xf32>
    %59 = arith.maximumf %57, %58 : vector<32x16xf32>
    %c0_27 = arith.constant 0 : index
    %c0_28 = arith.constant 0 : index
    %60 = vector.load %arg6[%c0_27, %c0_28] : memref<32x16xf32, #tpu.memory_space<vmem>>, vector<32x16xf32>
    tpu.vector_store %arg6[%c0_27, %c0_28], %59 {strides = array<i32>} : memref<32x16xf32, #tpu.memory_space<vmem>>, vector<32x16xf32>,
    %c0_29 = arith.constant 0 : index
    %c0_30 = arith.constant 0 : index
    %61 = vector.load %arg7[%c0_29, %c0_30] : memref<8x32xf32, #tpu.memory_space<vmem>>, vector<8x32xf32>
    tpu.vector_store %arg7[%c0_29, %c0_30], %51 {strides = array<i32>} : memref<8x32xf32, #tpu.memory_space<vmem>>, vector<8x32xf32>,
    return
  }
}

</mosaic_0001>

<llo_original>
// kernel: tpu_custom_call.1
$region0: #{tpu_custom_call.1}
  #allocation0 [shape = 'u32[]', space=smem, size = 0x4, offset = 0x4, fixed_abs, tag = 'smem constant byte address 0x4 - core index']
  #allocation1 [shape = 'u32[144,128]{1,0:T(1,128)}', space=vmem, size = 0x12000, scoped, tag = 'internal scratch']
  %s0 = inlined_call_operand.vmem [shape: f32[64,16], index: 0, kind: input, shape index: {}]
  %s1 = inlined_call_operand.vmem [shape: f32[16,32], index: 1, kind: input, shape index: {}]
  %s2 = inlined_call_operand.vmem [shape: f32[32,32], index: 2, kind: input, shape index: {}]
  %s3 = inlined_call_operand.vmem [shape: f32[1,32], index: 3, kind: input, shape index: {}]
  %s4 = inlined_call_operand.vmem [shape: f32[1,16], index: 4, kind: input, shape index: {}]
  %s5 = inlined_call_operand.vmem [shape: f32[32,16], index: 5, kind: input, shape index: {}]
  %s6 = inlined_call_operand.vmem [shape: f32[32,16], index: 6, kind: output, shape index: {0}]
  %s7 = inlined_call_operand.hbm [shape: f32[8,32], index: 7, kind: output, shape index: {1}]
  %8 = xla_tuple %s6, %s7
  %s9 = sld [smem:[#allocation0]]
  $region42: #{tpu_custom_call.1} parent=0
    _
  %s11 = ssub.s32 1, %s9
  %s12 = scalar_select 0, %s11, %s9
  $region1: #{tpu_custom_call.1} parent=0
    #allocation2 [shape = 'u8[4096]{0}', space=vmem, size = 0x1000, scoped, tag = 'output window, operand 1, single buffered']
    #allocation3 [shape = 's32[1]{0}', space=sflag, size = 0x4, scoped, tag = 'scoped memory for tpu_custom_call.1']
    %13 = vsyncpa [#allocation3], 0
    // Predicated region
    $region2: #{tpu_custom_call.1} parent=1 // pred_check
      _
    $region3: #{tpu_custom_call.1} parent=1 // pred_check_branch
      %15 = sbr.rel (0) target = $region5
    $region4: #{tpu_custom_call.1} parent=1 // pred_region
      _
    $region5: #{tpu_custom_call.1} parent=1 // pred_fallthru
      _
    // Predicated region
    $region6: #{tpu_custom_call.1} parent=1 // pred_check
      _
    $region7: #{tpu_custom_call.1} parent=1 // pred_check_branch
      %17 = sbr.rel (0) target = $region9
    $region8: #{tpu_custom_call.1} parent=1 // pred_region
      _
    $region9: #{tpu_custom_call.1} parent=1 // pred_fallthru
      _
    // Predicated region
    $region10: #{tpu_custom_call.1} parent=1 // pred_check
      _
    $region11: #{tpu_custom_call.1} parent=1 // pred_check_branch
      %19 = sbr.rel (0) target = $region13
    $region12: #{tpu_custom_call.1} parent=1 // pred_region
      _
    $region13: #{tpu_custom_call.1} parent=1 // pred_fallthru
      _
    // Predicated region
    $region14: #{tpu_custom_call.1} parent=1 // pred_check
      _
    $region15: #{tpu_custom_call.1} parent=1 // pred_check_branch
      %21 = sbr.rel (0) target = $region17
    $region16: #{tpu_custom_call.1} parent=1 // pred_region
      _
    $region17: #{tpu_custom_call.1} parent=1 // pred_fallthru
      _
    // Predicated region
    $region18: #{tpu_custom_call.1} parent=1 // pred_check
      _
    $region19: #{tpu_custom_call.1} parent=1 // pred_check_branch
      %23 = sbr.rel (0) target = $region21
    $region20: #{tpu_custom_call.1} parent=1 // pred_region
      _
    $region21: #{tpu_custom_call.1} parent=1 // pred_fallthru
      _
    // Predicated region
    $region22: #{tpu_custom_call.1} parent=1 // pred_check
      _
    $region23: #{tpu_custom_call.1} parent=1 // pred_check_branch
      %25 = sbr.rel (0) target = $region25
    $region24: #{tpu_custom_call.1} parent=1 // pred_region
      _
    $region25: #{tpu_custom_call.1} parent=1 // pred_fallthru
      _
    %v26 = vld [vmem:[%s2] sm:$0xff]
    %v27 = vld [vmem:[%s2 + $0x8] sm:$0xff]
    %v28 = vld [vmem:[%s2 + $0x10] sm:$0xff]
    %v29 = vld [vmem:[%s2 + $0x18] sm:$0xff]
    %v30 = vld [vmem:[%s3] sm:$0x1]
    %v32 = vlaneseq
    %v33 = vshrl.u32 %v32, 7
    %v34 = vsub.s32 0, %v33
    %v35 = vrot.slane %v30, %v34
    %v37 = vld [vmem:[%s0] sm:$0xff]
    %v38 = vld [vmem:[%s0 + $0x8] sm:$0xff]
    %v39 = vld [vmem:[%s0 + $0x10] sm:$0xff]
    %v40 = vld [vmem:[%s0 + $0x18] sm:$0xff]
    %v41 = vld [vmem:[%s0 + $0x20] sm:$0xff]
    %v42 = vld [vmem:[%s0 + $0x28] sm:$0xff]
    %v43 = vld [vmem:[%s0 + $0x30] sm:$0xff]
    %v44 = vld [vmem:[%s0 + $0x38] sm:$0xff]
    %v45 = vld [vmem:[%s1] sm:$0xff]
    %v46 = vld [vmem:[%s1 + $0x8] sm:$0xff]
    %vm47 = vcmask 130048
    %v49 = vsel %vm47, %v37, 0
    %v52 = vsel %vm47, %v38, 0
    %v55 = vsel %vm47, %v39, 0
    %v58 = vsel %vm47, %v40, 0
    %v61 = vsel %vm47, %v41, 0
    %v64 = vsel %vm47, %v42, 0
    %v67 = vsel %vm47, %v43, 0
    %v70 = vsel %vm47, %v44, 0
    %72 = vmatprep.subr.mxu0 0.0
    %73 = vmatpush1.msra.mxu0 %v45
    %74 = vmatprep.subr.mxu0 0.0
    %75 = vmatpush1.msra.mxu0 %v46
    %76 = vmatprep.subr.mxu0 0.0
    %77 = vmatpush1.msra.mxu0 0.0
    %78 = vmatprep.subr.mxu0 0.0
    %79 = vmatpush1.msra.mxu0 0.0
    %80 = vmatprep.subr.mxu0 0.0
    %81 = vmatpush1.msra.mxu0 0.0
    %82 = vmatprep.subr.mxu0 0.0
    %83 = vmatpush1.msra.mxu0 0.0
    %84 = vmatprep.subr.mxu0 0.0
    %85 = vmatpush1.msra.mxu0 0.0
    %86 = vmatprep.subr.mxu0 0.0
    %87 = vmatpush1.msra.mxu0 0.0
    %88 = vmatprep.subr.mxu0 0.0
    %89 = vmatpush1.msra.mxu0 0.0
    %90 = vmatprep.subr.mxu0 0.0
    %91 = vmatpush1.msra.mxu0 0.0
    %92 = vmatprep.subr.mxu0 0.0
    %93 = vmatpush1.msra.mxu0 0.0
    %94 = vmatprep.subr.mxu0 0.0
    %95 = vmatpush1.msra.mxu0 0.0
    %96 = vmatprep.subr.mxu0 0.0
    %97 = vmatpush1.msra.mxu0 0.0
    %98 = vmatprep.subr.mxu0 0.0
    %99 = vmatpush1.msra.mxu0 0.0
    %100 = vmatprep.subr.mxu0 0.0
    %101 = vmatpush1.msra.mxu0 0.0
    %102 = vmatprep.subr.mxu0 0.0
    %103 = vmatpush1.msra.mxu0 0.0
    %104 = vmatprep.subr.mxu0 0.0
    %105 = vmatpush1.msra.mxu0 0.0
    %106 = vmatprep.subr.mxu0 0.0
    %107 = vmatpush1.msra.mxu0 0.0
    %108 = vmatprep.subr.mxu0 0.0
    %109 = vmatpush1.msra.mxu0 0.0
    %110 = vmatprep.subr.mxu0 0.0
    %111 = vmatpush1.msra.mxu0 0.0
    %112 = vmatprep.subr.mxu0 0.0
    %113 = vmatpush1.msra.mxu0 0.0
    %114 = vmatprep.subr.mxu0 0.0
    %115 = vmatpush1.msra.mxu0 0.0
    %116 = vmatprep.subr.mxu0 0.0
    %117 = vmatpush1.msra.mxu0 0.0
    %118 = vmatprep.subr.mxu0 0.0
    %119 = vmatpush1.msra.mxu0 0.0
    %120 = vmatprep.subr.mxu0 0.0
    %121 = vmatpush1.msra.mxu0 0.0
    %122 = vmatprep.subr.mxu0 0.0
    %123 = vmatpush1.msra.mxu0 0.0
    %124 = vmatprep.subr.mxu0 0.0
    %125 = vmatpush1.msra.mxu0 0.0
    %126 = vmatprep.subr.mxu0 0.0
    %127 = vmatpush1.msra.mxu0 0.0
    %128 = vmatprep.subr.mxu0 0.0
    %129 = vmatpush1.msra.mxu0 0.0
    %130 = vmatprep.subr.mxu0 0.0
    %131 = vmatpush1.msra.mxu0 0.0
    %132 = vmatprep.subr.mxu0 0.0
    %133 = vmatpush1.msra.mxu0 0.0
    %134 = vmatprep.subr.mxu0 0.0
    %135 = vmatpush1.msra.mxu0 0.0
    %136 = vmatprep.mubr.f32.mxu0 0.0
    %137 = vmatmul.mubr.f32.gmra.mrb[0].mxu0 %v49
    %v138 = vpop.f32.mrb[0].mxu0
    %v139 = vadd.f32 %v35, %v138
    %v140 = vpop.f32.mrb[0].mxu0
    %141 = vmatprep.mubr.f32.mxu0 0.0
    %142 = vmatmul.mubr.f32.gmra.mrb[0].mxu0 %v52
    %v143 = vpop.f32.mrb[0].mxu0
    %v144 = vadd.f32 %v35, %v143
    %v145 = vpop.f32.mrb[0].mxu0
    %146 = vmatprep.mubr.f32.mxu0 0.0
    %147 = vmatmul.mubr.f32.gmra.mrb[0].mxu0 %v55
    %v148 = vpop.f32.mrb[0].mxu0
    %v149 = vadd.f32 %v35, %v148
    %v150 = vpop.f32.mrb[0].mxu0
    %151 = vmatprep.mubr.f32.mxu0 0.0
    %152 = vmatmul.mubr.f32.gmra.mrb[0].mxu0 %v58
    %v153 = vpop.f32.mrb[0].mxu0
    %v154 = vadd.f32 %v35, %v153
    %v155 = vpop.f32.mrb[0].mxu0
    %156 = vmatprep.mubr.f32.mxu0 0.0
    %157 = vmatmul.mubr.f32.gmra.mrb[0].mxu0 %v61
    %v158 = vpop.f32.mrb[0].mxu0
    %v159 = vadd.f32 %v35, %v158
    %v160 = vpop.f32.mrb[0].mxu0
    %161 = vmatprep.mubr.f32.mxu0 0.0
    %162 = vmatmul.mubr.f32.gmra.mrb[0].mxu0 %v64
    %v163 = vpop.f32.mrb[0].mxu0
    %v164 = vadd.f32 %v35, %v163
    %v165 = vpop.f32.mrb[0].mxu0
    %166 = vmatprep.mubr.f32.mxu0 0.0
    %167 = vmatmul.mubr.f32.gmra.mrb[0].mxu0 %v67
    %v168 = vpop.f32.mrb[0].mxu0
    %v169 = vadd.f32 %v35, %v168
    %v170 = vpop.f32.mrb[0].mxu0
    %171 = vmatprep.mubr.f32.mxu0 0.0
    %172 = vmatmul.mubr.f32.gmra.mrb[0].mxu0 %v70
    %v173 = vpop.f32.mrb[0].mxu0
    %v174 = vadd.f32 %v35, %v173
    %v175 = vpop.f32.mrb[0].mxu0
    %176 = vdwg.mxu0
    %vm177 = vcmask 261120
    %v179 = vsel %vm177, 0.0, 0
    %181 = vmatprep.subr.mxu0 0.0
    %182 = vmatpush1.msra.mxu0 %v26
    %183 = vmatprep.subr.mxu0 0.0
    %184 = vmatpush1.msra.mxu0 %v27
    %185 = vmatprep.subr.mxu0 0.0
    %186 = vmatpush1.msra.mxu0 %v28
    %187 = vmatprep.subr.mxu0 0.0
    %188 = vmatpush1.msra.mxu0 %v29
    %189 = vmatprep.subr.mxu0 0.0
    %190 = vmatpush1.msra.mxu0 0.0
    %191 = vmatprep.subr.mxu0 0.0
    %192 = vmatpush1.msra.mxu0 0.0
    %193 = vmatprep.subr.mxu0 0.0
    %194 = vmatpush1.msra.mxu0 0.0
    %195 = vmatprep.subr.mxu0 0.0
    %196 = vmatpush1.msra.mxu0 0.0
    %197 = vmatprep.subr.mxu0 0.0
    %198 = vmatpush1.msra.mxu0 0.0
    %199 = vmatprep.subr.mxu0 0.0
    %200 = vmatpush1.msra.mxu0 0.0
    %201 = vmatprep.subr.mxu0 0.0
    %202 = vmatpush1.msra.mxu0 0.0
    %203 = vmatprep.subr.mxu0 0.0
    %204 = vmatpush1.msra.mxu0 0.0
    %205 = vmatprep.subr.mxu0 0.0
    %206 = vmatpush1.msra.mxu0 0.0
    %207 = vmatprep.subr.mxu0 0.0
    %208 = vmatpush1.msra.mxu0 0.0
    %209 = vmatprep.subr.mxu0 0.0
    %210 = vmatpush1.msra.mxu0 0.0
    %211 = vmatprep.subr.mxu0 0.0
    %212 = vmatpush1.msra.mxu0 0.0
    %213 = vmatprep.subr.mxu0 0.0
    %214 = vmatpush1.msra.mxu0 0.0
    %215 = vmatprep.subr.mxu0 0.0
    %216 = vmatpush1.msra.mxu0 0.0
    %217 = vmatprep.subr.mxu0 0.0
    %218 = vmatpush1.msra.mxu0 0.0
    %219 = vmatprep.subr.mxu0 0.0
    %220 = vmatpush1.msra.mxu0 0.0
    %221 = vmatprep.subr.mxu0 0.0
    %222 = vmatpush1.msra.mxu0 0.0
    %223 = vmatprep.subr.mxu0 0.0
    %224 = vmatpush1.msra.mxu0 0.0
    %225 = vmatprep.subr.mxu0 0.0
    %226 = vmatpush1.msra.mxu0 0.0
    %227 = vmatprep.subr.mxu0 0.0
    %228 = vmatpush1.msra.mxu0 0.0
    %229 = vmatprep.subr.mxu0 0.0
    %230 = vmatpush1.msra.mxu0 0.0
    %231 = vmatprep.subr.mxu0 0.0
    %232 = vmatpush1.msra.mxu0 0.0
    %233 = vmatprep.subr.mxu0 0.0
    %234 = vmatpush1.msra.mxu0 0.0
    %235 = vmatprep.subr.mxu0 0.0
    %236 = vmatpush1.msra.mxu0 0.0
    %237 = vmatprep.subr.mxu0 0.0
    %238 = vmatpush1.msra.mxu0 0.0
    %239 = vmatprep.subr.mxu0 0.0
    %240 = vmatpush1.msra.mxu0 0.0
    %241 = vmatprep.subr.mxu0 0.0
    %242 = vmatpush1.msra.mxu0 0.0
    %243 = vmatprep.subr.mxu0 0.0
    %244 = vmatpush1.msra.mxu0 0.0
    %245 = vmatprep.mubr.f32.mxu0 0.0
    %246 = vmatmul.mubr.f32.gmra.mrb[0].mxu0 %v179
    %v247 = vpop.f32.mrb[0].mxu0
    %v248 = vadd.f32 0.0, %v247
    %v249 = vpop.f32.mrb[0].mxu0
    %250 = vdwg.mxu0
    %v251 = vadd.f32 %v139, %v248
    %v252 = vtanh.pop %v251
    %v254 = vsel %vm177, %v252, 0
    %256 = vmatprep.subr.mxu0 0.0
    %257 = vmatpush1.msra.mxu0 %v26
    %258 = vmatprep.subr.mxu0 0.0
    %259 = vmatpush1.msra.mxu0 %v27
    %260 = vmatprep.subr.mxu0 0.0
    %261 = vmatpush1.msra.mxu0 %v28
    %262 = vmatprep.subr.mxu0 0.0
    %263 = vmatpush1.msra.mxu0 %v29
    %264 = vmatprep.subr.mxu0 0.0
    %265 = vmatpush1.msra.mxu0 0.0
    %266 = vmatprep.subr.mxu0 0.0
    %267 = vmatpush1.msra.mxu0 0.0
    %268 = vmatprep.subr.mxu0 0.0
    %269 = vmatpush1.msra.mxu0 0.0
    %270 = vmatprep.subr.mxu0 0.0
    %271 = vmatpush1.msra.mxu0 0.0
    %272 = vmatprep.subr.mxu0 0.0
    %273 = vmatpush1.msra.mxu0 0.0
    %274 = vmatprep.subr.mxu0 0.0
    %275 = vmatpush1.msra.mxu0 0.0
    %276 = vmatprep.subr.mxu0 0.0
    %277 = vmatpush1.msra.mxu0 0.0
    %278 = vmatprep.subr.mxu0 0.0
    %279 = vmatpush1.msra.mxu0 0.0
    %280 = vmatprep.subr.mxu0 0.0
    %281 = vmatpush1.msra.mxu0 0.0
    %282 = vmatprep.subr.mxu0 0.0
    %283 = vmatpush1.msra.mxu0 0.0
    %284 = vmatprep.subr.mxu0 0.0
    %285 = vmatpush1.msra.mxu0 0.0
    %286 = vmatprep.subr.mxu0 0.0
    %287 = vmatpush1.msra.mxu0 0.0
    %288 = vmatprep.subr.mxu0 0.0
    %289 = vmatpush1.msra.mxu0 0.0
    %290 = vmatprep.subr.mxu0 0.0
    %291 = vmatpush1.msra.mxu0 0.0
    %292 = vmatprep.subr.mxu0 0.0
    %293 = vmatpush1.msra.mxu0 0.0
    %294 = vmatprep.subr.mxu0 0.0
    %295 = vmatpush1.msra.mxu0 0.0
    %296 = vmatprep.subr.mxu0 0.0
    %297 = vmatpush1.msra.mxu0 0.0
    %298 = vmatprep.subr.mxu0 0.0
    %299 = vmatpush1.msra.mxu0 0.0
    %300 = vmatprep.subr.mxu0 0.0
    %301 = vmatpush1.msra.mxu0 0.0
    %302 = vmatprep.subr.mxu0 0.0
    %303 = vmatpush1.msra.mxu0 0.0
    %304 = vmatprep.subr.mxu0 0.0
    %305 = vmatpush1.msra.mxu0 0.0
    %306 = vmatprep.subr.mxu0 0.0
    %307 = vmatpush1.msra.mxu0 0.0
    %308 = vmatprep.subr.mxu0 0.0
    %309 = vmatpush1.msra.mxu0 0.0
    %310 = vmatprep.subr.mxu0 0.0
    %311 = vmatpush1.msra.mxu0 0.0
    %312 = vmatprep.subr.mxu0 0.0
    %313 = vmatpush1.msra.mxu0 0.0
    %314 = vmatprep.subr.mxu0 0.0
    %315 = vmatpush1.msra.mxu0 0.0
    %316 = vmatprep.subr.mxu0 0.0
    %317 = vmatpush1.msra.mxu0 0.0
    %318 = vmatprep.subr.mxu0 0.0
    %319 = vmatpush1.msra.mxu0 0.0
    %320 = vmatprep.mubr.f32.mxu0 0.0
    %321 = vmatmul.mubr.f32.gmra.mrb[0].mxu0 %v254
    %v322 = vpop.f32.mrb[0].mxu0
    %v323 = vadd.f32 0.0, %v322
    %v324 = vpop.f32.mrb[0].mxu0
    %325 = vdwg.mxu0
    %v326 = vadd.f32 %v144, %v323
    %v327 = vtanh.pop %v326
    %v329 = vsel %vm177, %v327, 0
    %331 = vmatprep.subr.mxu0 0.0
    %332 = vmatpush1.msra.mxu0 %v26
    %333 = vmatprep.subr.mxu0 0.0
    %334 = vmatpush1.msra.mxu0 %v27
    %335 = vmatprep.subr.mxu0 0.0
    %336 = vmatpush1.msra.mxu0 %v28
    %337 = vmatprep.subr.mxu0 0.0
    %338 = vmatpush1.msra.mxu0 %v29
    %339 = vmatprep.subr.mxu0 0.0
    %340 = vmatpush1.msra.mxu0 0.0
    %341 = vmatprep.subr.mxu0 0.0
    %342 = vmatpush1.msra.mxu0 0.0
    %343 = vmatprep.subr.mxu0 0.0
    %344 = vmatpush1.msra.mxu0 0.0
    %345 = vmatprep.subr.mxu0 0.0
    %346 = vmatpush1.msra.mxu0 0.0
    %347 = vmatprep.subr.mxu0 0.0
    %348 = vmatpush1.msra.mxu0 0.0
    %349 = vmatprep.subr.mxu0 0.0
    %350 = vmatpush1.msra.mxu0 0.0
    %351 = vmatprep.subr.mxu0 0.0
    %352 = vmatpush1.msra.mxu0 0.0
    %353 = vmatprep.subr.mxu0 0.0
    %354 = vmatpush1.msra.mxu0 0.0
    %355 = vmatprep.subr.mxu0 0.0
    %356 = vmatpush1.msra.mxu0 0.0
    %357 = vmatprep.subr.mxu0 0.0
    %358 = vmatpush1.msra.mxu0 0.0
    %359 = vmatprep.subr.mxu0 0.0
    %360 = vmatpush1.msra.mxu0 0.0
    %361 = vmatprep.subr.mxu0 0.0
    %362 = vmatpush1.msra.mxu0 0.0
    %363 = vmatprep.subr.mxu0 0.0
    %364 = vmatpush1.msra.mxu0 0.0
    %365 = vmatprep.subr.mxu0 0.0
    %366 = vmatpush1.msra.mxu0 0.0
    %367 = vmatprep.subr.mxu0 0.0
    %368 = vmatpush1.msra.mxu0 0.0
    %369 = vmatprep.subr.mxu0 0.0
    %370 = vmatpush1.msra.mxu0 0.0
    %371 = vmatprep.subr.mxu0 0.0
    %372 = vmatpush1.msra.mxu0 0.0
    %373 = vmatprep.subr.mxu0 0.0
    %374 = vmatpush1.msra.mxu0 0.0
    %375 = vmatprep.subr.mxu0 0.0
    %376 = vmatpush1.msra.mxu0 0.0
    %377 = vmatprep.subr.mxu0 0.0
    %378 = vmatpush1.msra.mxu0 0.0
    %379 = vmatprep.subr.mxu0 0.0
    %380 = vmatpush1.msra.mxu0 0.0
    %381 = vmatprep.subr.mxu0 0.0
    %382 = vmatpush1.msra.mxu0 0.0
    %383 = vmatprep.subr.mxu0 0.0
    %384 = vmatpush1.msra.mxu0 0.0
    %385 = vmatprep.subr.mxu0 0.0
    %386 = vmatpush1.msra.mxu0 0.0
    %387 = vmatprep.subr.mxu0 0.0
    %388 = vmatpush1.msra.mxu0 0.0
    %389 = vmatprep.subr.mxu0 0.0
    %390 = vmatpush1.msra.mxu0 0.0
    %391 = vmatprep.subr.mxu0 0.0
    %392 = vmatpush1.msra.mxu0 0.0
    %393 = vmatprep.subr.mxu0 0.0
    %394 = vmatpush1.msra.mxu0 0.0
    %395 = vmatprep.mubr.f32.mxu0 0.0
    %396 = vmatmul.mubr.f32.gmra.mrb[0].mxu0 %v329
    %v397 = vpop.f32.mrb[0].mxu0
    %v398 = vadd.f32 0.0, %v397
    %v399 = vpop.f32.mrb[0].mxu0
    %400 = vdwg.mxu0
    %v401 = vadd.f32 %v149, %v398
    %v402 = vtanh.pop %v401
    %v404 = vsel %vm177, %v402, 0
    %406 = vmatprep.subr.mxu0 0.0
    %407 = vmatpush1.msra.mxu0 %v26
    %408 = vmatprep.subr.mxu0 0.0
    %409 = vmatpush1.msra.mxu0 %v27
    %410 = vmatprep.subr.mxu0 0.0
    %411 = vmatpush1.msra.mxu0 %v28
    %412 = vmatprep.subr.mxu0 0.0
    %413 = vmatpush1.msra.mxu0 %v29
    %414 = vmatprep.subr.mxu0 0.0
    %415 = vmatpush1.msra.mxu0 0.0
    %416 = vmatprep.subr.mxu0 0.0
    %417 = vmatpush1.msra.mxu0 0.0
    %418 = vmatprep.subr.mxu0 0.0
    %419 = vmatpush1.msra.mxu0 0.0
    %420 = vmatprep.subr.mxu0 0.0
    %421 = vmatpush1.msra.mxu0 0.0
    %422 = vmatprep.subr.mxu0 0.0
    %423 = vmatpush1.msra.mxu0 0.0
    %424 = vmatprep.subr.mxu0 0.0
    %425 = vmatpush1.msra.mxu0 0.0
    %426 = vmatprep.subr.mxu0 0.0
    %427 = vmatpush1.msra.mxu0 0.0
    %428 = vmatprep.subr.mxu0 0.0
    %429 = vmatpush1.msra.mxu0 0.0
    %430 = vmatprep.subr.mxu0 0.0
    %431 = vmatpush1.msra.mxu0 0.0
    %432 = vmatprep.subr.mxu0 0.0
    %433 = vmatpush1.msra.mxu0 0.0
    %434 = vmatprep.subr.mxu0 0.0
    %435 = vmatpush1.msra.mxu0 0.0
    %436 = vmatprep.subr.mxu0 0.0
    %437 = vmatpush1.msra.mxu0 0.0
    %438 = vmatprep.subr.mxu0 0.0
    %439 = vmatpush1.msra.mxu0 0.0
    %440 = vmatprep.subr.mxu0 0.0
    %441 = vmatpush1.msra.mxu0 0.0
    %442 = vmatprep.subr.mxu0 0.0
    %443 = vmatpush1.msra.mxu0 0.0
    %444 = vmatprep.subr.mxu0 0.0
    %445 = vmatpush1.msra.mxu0 0.0
    %446 = vmatprep.subr.mxu0 0.0
    %447 = vmatpush1.msra.mxu0 0.0
    %448 = vmatprep.subr.mxu0 0.0
    %449 = vmatpush1.msra.mxu0 0.0
    %450 = vmatprep.subr.mxu0 0.0
    %451 = vmatpush1.msra.mxu0 0.0
    %452 = vmatprep.subr.mxu0 0.0
    %453 = vmatpush1.msra.mxu0 0.0
    %454 = vmatprep.subr.mxu0 0.0
    %455 = vmatpush1.msra.mxu0 0.0
    %456 = vmatprep.subr.mxu0 0.0
    %457 = vmatpush1.msra.mxu0 0.0
    %458 = vmatprep.subr.mxu0 0.0
    %459 = vmatpush1.msra.mxu0 0.0
    %460 = vmatprep.subr.mxu0 0.0
    %461 = vmatpush1.msra.mxu0 0.0
    %462 = vmatprep.subr.mxu0 0.0
    %463 = vmatpush1.msra.mxu0 0.0
    %464 = vmatprep.subr.mxu0 0.0
    %465 = vmatpush1.msra.mxu0 0.0
    %466 = vmatprep.subr.mxu0 0.0
    %467 = vmatpush1.msra.mxu0 0.0
    %468 = vmatprep.subr.mxu0 0.0
    %469 = vmatpush1.msra.mxu0 0.0
    %470 = vmatprep.mubr.f32.mxu0 0.0
    %471 = vmatmul.mubr.f32.gmra.mrb[0].mxu0 %v404
    %v472 = vpop.f32.mrb[0].mxu0
    %v473 = vadd.f32 0.0, %v472
    %v474 = vpop.f32.mrb[0].mxu0
    %475 = vdwg.mxu0
    %v476 = vadd.f32 %v154, %v473
    %v477 = vtanh.pop %v476
    %v479 = vsel %vm177, %v477, 0
    %481 = vmatprep.subr.mxu0 0.0
    %482 = vmatpush1.msra.mxu0 %v26
    %483 = vmatprep.subr.mxu0 0.0
    %484 = vmatpush1.msra.mxu0 %v27
    %485 = vmatprep.subr.mxu0 0.0
    %486 = vmatpush1.msra.mxu0 %v28
    %487 = vmatprep.subr.mxu0 0.0
    %488 = vmatpush1.msra.mxu0 %v29
    %489 = vmatprep.subr.mxu0 0.0
    %490 = vmatpush1.msra.mxu0 0.0
    %491 = vmatprep.subr.mxu0 0.0
    %492 = vmatpush1.msra.mxu0 0.0
    %493 = vmatprep.subr.mxu0 0.0
    %494 = vmatpush1.msra.mxu0 0.0
    %495 = vmatprep.subr.mxu0 0.0
    %496 = vmatpush1.msra.mxu0 0.0
    %497 = vmatprep.subr.mxu0 0.0
    %498 = vmatpush1.msra.mxu0 0.0
    %499 = vmatprep.subr.mxu0 0.0
    %500 = vmatpush1.msra.mxu0 0.0
    %501 = vmatprep.subr.mxu0 0.0
    %502 = vmatpush1.msra.mxu0 0.0
    %503 = vmatprep.subr.mxu0 0.0
    %504 = vmatpush1.msra.mxu0 0.0
    %505 = vmatprep.subr.mxu0 0.0
    %506 = vmatpush1.msra.mxu0 0.0
    %507 = vmatprep.subr.mxu0 0.0
    %508 = vmatpush1.msra.mxu0 0.0
    %509 = vmatprep.subr.mxu0 0.0
    %510 = vmatpush1.msra.mxu0 0.0
    %511 = vmatprep.subr.mxu0 0.0
    %512 = vmatpush1.msra.mxu0 0.0
    %513 = vmatprep.subr.mxu0 0.0
    %514 = vmatpush1.msra.mxu0 0.0
    %515 = vmatprep.subr.mxu0 0.0
    %516 = vmatpush1.msra.mxu0 0.0
    %517 = vmatprep.subr.mxu0 0.0
    %518 = vmatpush1.msra.mxu0 0.0
    %519 = vmatprep.subr.mxu0 0.0
    %520 = vmatpush1.msra.mxu0 0.0
    %521 = vmatprep.subr.mxu0 0.0
    %522 = vmatpush1.msra.mxu0 0.0
    %523 = vmatprep.subr.mxu0 0.0
    %524 = vmatpush1.msra.mxu0 0.0
    %525 = vmatprep.subr.mxu0 0.0
    %526 = vmatpush1.msra.mxu0 0.0
    %527 = vmatprep.subr.mxu0 0.0
    %528 = vmatpush1.msra.mxu0 0.0
    %529 = vmatprep.subr.mxu0 0.0
    %530 = vmatpush1.msra.mxu0 0.0
    %531 = vmatprep.subr.mxu0 0.0
    %532 = vmatpush1.msra.mxu0 0.0
    %533 = vmatprep.subr.mxu0 0.0
    %534 = vmatpush1.msra.mxu0 0.0
    %535 = vmatprep.subr.mxu0 0.0
    %536 = vmatpush1.msra.mxu0 0.0
    %537 = vmatprep.subr.mxu0 0.0
    %538 = vmatpush1.msra.mxu0 0.0
    %539 = vmatprep.subr.mxu0 0.0
    %540 = vmatpush1.msra.mxu0 0.0
    %541 = vmatprep.subr.mxu0 0.0
    %542 = vmatpush1.msra.mxu0 0.0
    %543 = vmatprep.subr.mxu0 0.0
    %544 = vmatpush1.msra.mxu0 0.0
    %545 = vmatprep.mubr.f32.mxu0 0.0
    %546 = vmatmul.mubr.f32.gmra.mrb[0].mxu0 %v479
    %v547 = vpop.f32.mrb[0].mxu0
    %v548 = vadd.f32 0.0, %v547
    %v549 = vpop.f32.mrb[0].mxu0
    %550 = vdwg.mxu0
    %v551 = vadd.f32 %v159, %v548
    %v552 = vtanh.pop %v551
    %v554 = vsel %vm177, %v552, 0
    %556 = vmatprep.subr.mxu0 0.0
    %557 = vmatpush1.msra.mxu0 %v26
    %558 = vmatprep.subr.mxu0 0.0
    %559 = vmatpush1.msra.mxu0 %v27
    %560 = vmatprep.subr.mxu0 0.0
    %561 = vmatpush1.msra.mxu0 %v28
    %562 = vmatprep.subr.mxu0 0.0
    %563 = vmatpush1.msra.mxu0 %v29
    %564 = vmatprep.subr.mxu0 0.0
    %565 = vmatpush1.msra.mxu0 0.0
    %566 = vmatprep.subr.mxu0 0.0
    %567 = vmatpush1.msra.mxu0 0.0
    %568 = vmatprep.subr.mxu0 0.0
    %569 = vmatpush1.msra.mxu0 0.0
    %570 = vmatprep.subr.mxu0 0.0
    %571 = vmatpush1.msra.mxu0 0.0
    %572 = vmatprep.subr.mxu0 0.0
    %573 = vmatpush1.msra.mxu0 0.0
    %574 = vmatprep.subr.mxu0 0.0
    %575 = vmatpush1.msra.mxu0 0.0
    %576 = vmatprep.subr.mxu0 0.0
    %577 = vmatpush1.msra.mxu0 0.0
    %578 = vmatprep.subr.mxu0 0.0
    %579 = vmatpush1.msra.mxu0 0.0
    %580 = vmatprep.subr.mxu0 0.0
    %581 = vmatpush1.msra.mxu0 0.0
    %582 = vmatprep.subr.mxu0 0.0
    %583 = vmatpush1.msra.mxu0 0.0
    %584 = vmatprep.subr.mxu0 0.0
    %585 = vmatpush1.msra.mxu0 0.0
    %586 = vmatprep.subr.mxu0 0.0
    %587 = vmatpush1.msra.mxu0 0.0
    %588 = vmatprep.subr.mxu0 0.0
    %589 = vmatpush1.msra.mxu0 0.0
    %590 = vmatprep.subr.mxu0 0.0
    %591 = vmatpush1.msra.mxu0 0.0
    %592 = vmatprep.subr.mxu0 0.0
    %593 = vmatpush1.msra.mxu0 0.0
    %594 = vmatprep.subr.mxu0 0.0
    %595 = vmatpush1.msra.mxu0 0.0
    %596 = vmatprep.subr.mxu0 0.0
    %597 = vmatpush1.msra.mxu0 0.0
    %598 = vmatprep.subr.mxu0 0.0
    %599 = vmatpush1.msra.mxu0 0.0
    %600 = vmatprep.subr.mxu0 0.0
    %601 = vmatpush1.msra.mxu0 0.0
    %602 = vmatprep.subr.mxu0 0.0
    %603 = vmatpush1.msra.mxu0 0.0
    %604 = vmatprep.subr.mxu0 0.0
    %605 = vmatpush1.msra.mxu0 0.0
    %606 = vmatprep.subr.mxu0 0.0
    %607 = vmatpush1.msra.mxu0 0.0
    %608 = vmatprep.subr.mxu0 0.0
    %609 = vmatpush1.msra.mxu0 0.0
    %610 = vmatprep.subr.mxu0 0.0
    %611 = vmatpush1.msra.mxu0 0.0
    %612 = vmatprep.subr.mxu0 0.0
    %613 = vmatpush1.msra.mxu0 0.0
    %614 = vmatprep.subr.mxu0 0.0
    %615 = vmatpush1.msra.mxu0 0.0
    %616 = vmatprep.subr.mxu0 0.0
    %617 = vmatpush1.msra.mxu0 0.0
    %618 = vmatprep.subr.mxu0 0.0
    %619 = vmatpush1.msra.mxu0 0.0
    %620 = vmatprep.mubr.f32.mxu0 0.0
    %621 = vmatmul.mubr.f32.gmra.mrb[0].mxu0 %v554
    %v622 = vpop.f32.mrb[0].mxu0
    %v623 = vadd.f32 0.0, %v622
    %v624 = vpop.f32.mrb[0].mxu0
    %625 = vdwg.mxu0
    %v626 = vadd.f32 %v164, %v623
    %v627 = vtanh.pop %v626
    %v629 = vsel %vm177, %v627, 0
    %631 = vmatprep.subr.mxu0 0.0
    %632 = vmatpush1.msra.mxu0 %v26
    %633 = vmatprep.subr.mxu0 0.0
    %634 = vmatpush1.msra.mxu0 %v27
    %635 = vmatprep.subr.mxu0 0.0
    %636 = vmatpush1.msra.mxu0 %v28
    %637 = vmatprep.subr.mxu0 0.0
    %638 = vmatpush1.msra.mxu0 %v29
    %639 = vmatprep.subr.mxu0 0.0
    %640 = vmatpush1.msra.mxu0 0.0
    %641 = vmatprep.subr.mxu0 0.0
    %642 = vmatpush1.msra.mxu0 0.0
    %643 = vmatprep.subr.mxu0 0.0
    %644 = vmatpush1.msra.mxu0 0.0
    %645 = vmatprep.subr.mxu0 0.0
    %646 = vmatpush1.msra.mxu0 0.0
    %647 = vmatprep.subr.mxu0 0.0
    %648 = vmatpush1.msra.mxu0 0.0
    %649 = vmatprep.subr.mxu0 0.0
    %650 = vmatpush1.msra.mxu0 0.0
    %651 = vmatprep.subr.mxu0 0.0
    %652 = vmatpush1.msra.mxu0 0.0
    %653 = vmatprep.subr.mxu0 0.0
    %654 = vmatpush1.msra.mxu0 0.0
    %655 = vmatprep.subr.mxu0 0.0
    %656 = vmatpush1.msra.mxu0 0.0
    %657 = vmatprep.subr.mxu0 0.0
    %658 = vmatpush1.msra.mxu0 0.0
    %659 = vmatprep.subr.mxu0 0.0
    %660 = vmatpush1.msra.mxu0 0.0
    %661 = vmatprep.subr.mxu0 0.0
    %662 = vmatpush1.msra.mxu0 0.0
    %663 = vmatprep.subr.mxu0 0.0
    %664 = vmatpush1.msra.mxu0 0.0
    %665 = vmatprep.subr.mxu0 0.0
    %666 = vmatpush1.msra.mxu0 0.0
    %667 = vmatprep.subr.mxu0 0.0
    %668 = vmatpush1.msra.mxu0 0.0
    %669 = vmatprep.subr.mxu0 0.0
    %670 = vmatpush1.msra.mxu0 0.0
    %671 = vmatprep.subr.mxu0 0.0
    %672 = vmatpush1.msra.mxu0 0.0
    %673 = vmatprep.subr.mxu0 0.0
    %674 = vmatpush1.msra.mxu0 0.0
    %675 = vmatprep.subr.mxu0 0.0
    %676 = vmatpush1.msra.mxu0 0.0
    %677 = vmatprep.subr.mxu0 0.0
    %678 = vmatpush1.msra.mxu0 0.0
    %679 = vmatprep.subr.mxu0 0.0
    %680 = vmatpush1.msra.mxu0 0.0
    %681 = vmatprep.subr.mxu0 0.0
    %682 = vmatpush1.msra.mxu0 0.0
    %683 = vmatprep.subr.mxu0 0.0
    %684 = vmatpush1.msra.mxu0 0.0
    %685 = vmatprep.subr.mxu0 0.0
    %686 = vmatpush1.msra.mxu0 0.0
    %687 = vmatprep.subr.mxu0 0.0
    %688 = vmatpush1.msra.mxu0 0.0
    %689 = vmatprep.subr.mxu0 0.0
    %690 = vmatpush1.msra.mxu0 0.0
    %691 = vmatprep.subr.mxu0 0.0
    %692 = vmatpush1.msra.mxu0 0.0
    %693 = vmatprep.subr.mxu0 0.0
    %694 = vmatpush1.msra.mxu0 0.0
    %695 = vmatprep.mubr.f32.mxu0 0.0
    %696 = vmatmul.mubr.f32.gmra.mrb[0].mxu0 %v629
    %v697 = vpop.f32.mrb[0].mxu0
    %v698 = vadd.f32 0.0, %v697
    %v699 = vpop.f32.mrb[0].mxu0
    %700 = vdwg.mxu0
    %v701 = vadd.f32 %v169, %v698
    %v702 = vtanh.pop %v701
    %v704 = vsel %vm177, %v702, 0
    %706 = vmatprep.subr.mxu0 0.0
    %707 = vmatpush1.msra.mxu0 %v26
    %708 = vmatprep.subr.mxu0 0.0
    %709 = vmatpush1.msra.mxu0 %v27
    %710 = vmatprep.subr.mxu0 0.0
    %711 = vmatpush1.msra.mxu0 %v28
    %712 = vmatprep.subr.mxu0 0.0
    %713 = vmatpush1.msra.mxu0 %v29
    %714 = vmatprep.subr.mxu0 0.0
    %715 = vmatpush1.msra.mxu0 0.0
    %716 = vmatprep.subr.mxu0 0.0
    %717 = vmatpush1.msra.mxu0 0.0
    %718 = vmatprep.subr.mxu0 0.0
    %719 = vmatpush1.msra.mxu0 0.0
    %720 = vmatprep.subr.mxu0 0.0
    %721 = vmatpush1.msra.mxu0 0.0
    %722 = vmatprep.subr.mxu0 0.0
    %723 = vmatpush1.msra.mxu0 0.0
    %724 = vmatprep.subr.mxu0 0.0
    %725 = vmatpush1.msra.mxu0 0.0
    %726 = vmatprep.subr.mxu0 0.0
    %727 = vmatpush1.msra.mxu0 0.0
    %728 = vmatprep.subr.mxu0 0.0
    %729 = vmatpush1.msra.mxu0 0.0
    %730 = vmatprep.subr.mxu0 0.0
    %731 = vmatpush1.msra.mxu0 0.0
    %732 = vmatprep.subr.mxu0 0.0
    %733 = vmatpush1.msra.mxu0 0.0
    %734 = vmatprep.subr.mxu0 0.0
    %735 = vmatpush1.msra.mxu0 0.0
    %736 = vmatprep.subr.mxu0 0.0
    %737 = vmatpush1.msra.mxu0 0.0
    %738 = vmatprep.subr.mxu0 0.0
    %739 = vmatpush1.msra.mxu0 0.0
    %740 = vmatprep.subr.mxu0 0.0
    %741 = vmatpush1.msra.mxu0 0.0
    %742 = vmatprep.subr.mxu0 0.0
    %743 = vmatpush1.msra.mxu0 0.0
    %744 = vmatprep.subr.mxu0 0.0
    %745 = vmatpush1.msra.mxu0 0.0
    %746 = vmatprep.subr.mxu0 0.0
    %747 = vmatpush1.msra.mxu0 0.0
    %748 = vmatprep.subr.mxu0 0.0
    %749 = vmatpush1.msra.mxu0 0.0
    %750 = vmatprep.subr.mxu0 0.0
    %751 = vmatpush1.msra.mxu0 0.0
    %752 = vmatprep.subr.mxu0 0.0
    %753 = vmatpush1.msra.mxu0 0.0
    %754 = vmatprep.subr.mxu0 0.0
    %755 = vmatpush1.msra.mxu0 0.0
    %756 = vmatprep.subr.mxu0 0.0
    %757 = vmatpush1.msra.mxu0 0.0
    %758 = vmatprep.subr.mxu0 0.0
    %759 = vmatpush1.msra.mxu0 0.0
    %760 = vmatprep.subr.mxu0 0.0
    %761 = vmatpush1.msra.mxu0 0.0
    %762 = vmatprep.subr.mxu0 0.0
    %763 = vmatpush1.msra.mxu0 0.0
    %764 = vmatprep.subr.mxu0 0.0
    %765 = vmatpush1.msra.mxu0 0.0
    %766 = vmatprep.subr.mxu0 0.0
    %767 = vmatpush1.msra.mxu0 0.0
    %768 = vmatprep.subr.mxu0 0.0
    %769 = vmatpush1.msra.mxu0 0.0
    %770 = vmatprep.mubr.f32.mxu0 0.0
    %771 = vmatmul.mubr.f32.gmra.mrb[0].mxu0 %v704
    %v772 = vpop.f32.mrb[0].mxu0
    %v773 = vadd.f32 0.0, %v772
    %v774 = vpop.f32.mrb[0].mxu0
    %775 = vdwg.mxu0
    %v776 = vadd.f32 %v174, %v773
    %v777 = vtanh.pop %v776
    %v779 = vsel %vm177, %v777, 0
    %781 = vmatprep.subr.mxu0 0.0
    %782 = vmatpush1.msra.mxu0 %v26
    %783 = vmatprep.subr.mxu0 0.0
    %784 = vmatpush1.msra.mxu0 %v27
    %785 = vmatprep.subr.mxu0 0.0
    %786 = vmatpush1.msra.mxu0 %v28
    %787 = vmatprep.subr.mxu0 0.0
    %788 = vmatpush1.msra.mxu0 %v29
    %789 = vmatprep.subr.mxu0 0.0
    %790 = vmatpush1.msra.mxu0 0.0
    %791 = vmatprep.subr.mxu0 0.0
    %792 = vmatpush1.msra.mxu0 0.0
    %793 = vmatprep.subr.mxu0 0.0
    %794 = vmatpush1.msra.mxu0 0.0
    %795 = vmatprep.subr.mxu0 0.0
    %796 = vmatpush1.msra.mxu0 0.0
    %797 = vmatprep.subr.mxu0 0.0
    %798 = vmatpush1.msra.mxu0 0.0
    %799 = vmatprep.subr.mxu0 0.0
    %800 = vmatpush1.msra.mxu0 0.0
    %801 = vmatprep.subr.mxu0 0.0
    %802 = vmatpush1.msra.mxu0 0.0
    %803 = vmatprep.subr.mxu0 0.0
    %804 = vmatpush1.msra.mxu0 0.0
    %805 = vmatprep.subr.mxu0 0.0
    %806 = vmatpush1.msra.mxu0 0.0
    %807 = vmatprep.subr.mxu0 0.0
    %808 = vmatpush1.msra.mxu0 0.0
    %809 = vmatprep.subr.mxu0 0.0
    %810 = vmatpush1.msra.mxu0 0.0
    %811 = vmatprep.subr.mxu0 0.0
    %812 = vmatpush1.msra.mxu0 0.0
    %813 = vmatprep.subr.mxu0 0.0
    %814 = vmatpush1.msra.mxu0 0.0
    %815 = vmatprep.subr.mxu0 0.0
    %816 = vmatpush1.msra.mxu0 0.0
    %817 = vmatprep.subr.mxu0 0.0
    %818 = vmatpush1.msra.mxu0 0.0
    %819 = vmatprep.subr.mxu0 0.0
    %820 = vmatpush1.msra.mxu0 0.0
    %821 = vmatprep.subr.mxu0 0.0
    %822 = vmatpush1.msra.mxu0 0.0
    %823 = vmatprep.subr.mxu0 0.0
    %824 = vmatpush1.msra.mxu0 0.0
    %825 = vmatprep.subr.mxu0 0.0
    %826 = vmatpush1.msra.mxu0 0.0
    %827 = vmatprep.subr.mxu0 0.0
    %828 = vmatpush1.msra.mxu0 0.0
    %829 = vmatprep.subr.mxu0 0.0
    %830 = vmatpush1.msra.mxu0 0.0
    %831 = vmatprep.subr.mxu0 0.0
    %832 = vmatpush1.msra.mxu0 0.0
    %833 = vmatprep.subr.mxu0 0.0
    %834 = vmatpush1.msra.mxu0 0.0
    %835 = vmatprep.subr.mxu0 0.0
    %836 = vmatpush1.msra.mxu0 0.0
    %837 = vmatprep.subr.mxu0 0.0
    %838 = vmatpush1.msra.mxu0 0.0
    %839 = vmatprep.subr.mxu0 0.0
    %840 = vmatpush1.msra.mxu0 0.0
    %841 = vmatprep.subr.mxu0 0.0
    %842 = vmatpush1.msra.mxu0 0.0
    %843 = vmatprep.subr.mxu0 0.0
    %844 = vmatpush1.msra.mxu0 0.0
    %845 = vmatprep.mubr.f32.mxu0 0.0
    %846 = vmatmul.mubr.f32.gmra.mrb[0].mxu0 %v779
    %v847 = vpop.f32.mrb[0].mxu0
    %v848 = vadd.f32 0.0, %v847
    %v849 = vpop.f32.mrb[0].mxu0
    %850 = vdwg.mxu0
    %v851 = vadd.f32 %v35, %v848
    %v852 = vtanh.pop %v851
    %v854 = vsel %vm177, %v852, 0
    %856 = vmatprep.subr.mxu0 0.0
    %857 = vmatpush1.msra.mxu0 %v26
    %858 = vmatprep.subr.mxu0 0.0
    %859 = vmatpush1.msra.mxu0 %v27
    %860 = vmatprep.subr.mxu0 0.0
    %861 = vmatpush1.msra.mxu0 %v28
    %862 = vmatprep.subr.mxu0 0.0
    %863 = vmatpush1.msra.mxu0 %v29
    %864 = vmatprep.subr.mxu0 0.0
    %865 = vmatpush1.msra.mxu0 0.0
    %866 = vmatprep.subr.mxu0 0.0
    %867 = vmatpush1.msra.mxu0 0.0
    %868 = vmatprep.subr.mxu0 0.0
    %869 = vmatpush1.msra.mxu0 0.0
    %870 = vmatprep.subr.mxu0 0.0
    %871 = vmatpush1.msra.mxu0 0.0
    %872 = vmatprep.subr.mxu0 0.0
    %873 = vmatpush1.msra.mxu0 0.0
    %874 = vmatprep.subr.mxu0 0.0
    %875 = vmatpush1.msra.mxu0 0.0
    %876 = vmatprep.subr.mxu0 0.0
    %877 = vmatpush1.msra.mxu0 0.0
    %878 = vmatprep.subr.mxu0 0.0
    %879 = vmatpush1.msra.mxu0 0.0
    %880 = vmatprep.subr.mxu0 0.0
    %881 = vmatpush1.msra.mxu0 0.0
    %882 = vmatprep.subr.mxu0 0.0
    %883 = vmatpush1.msra.mxu0 0.0
    %884 = vmatprep.subr.mxu0 0.0
    %885 = vmatpush1.msra.mxu0 0.0
    %886 = vmatprep.subr.mxu0 0.0
    %887 = vmatpush1.msra.mxu0 0.0
    %888 = vmatprep.subr.mxu0 0.0
    %889 = vmatpush1.msra.mxu0 0.0
    %890 = vmatprep.subr.mxu0 0.0
    %891 = vmatpush1.msra.mxu0 0.0
    %892 = vmatprep.subr.mxu0 0.0
    %893 = vmatpush1.msra.mxu0 0.0
    %894 = vmatprep.subr.mxu0 0.0
    %895 = vmatpush1.msra.mxu0 0.0
    %896 = vmatprep.subr.mxu0 0.0
    %897 = vmatpush1.msra.mxu0 0.0
    %898 = vmatprep.subr.mxu0 0.0
    %899 = vmatpush1.msra.mxu0 0.0
    %900 = vmatprep.subr.mxu0 0.0
    %901 = vmatpush1.msra.mxu0 0.0
    %902 = vmatprep.subr.mxu0 0.0
    %903 = vmatpush1.msra.mxu0 0.0
    %904 = vmatprep.subr.mxu0 0.0
    %905 = vmatpush1.msra.mxu0 0.0
    %906 = vmatprep.subr.mxu0 0.0
    %907 = vmatpush1.msra.mxu0 0.0
    %908 = vmatprep.subr.mxu0 0.0
    %909 = vmatpush1.msra.mxu0 0.0
    %910 = vmatprep.subr.mxu0 0.0
    %911 = vmatpush1.msra.mxu0 0.0
    %912 = vmatprep.subr.mxu0 0.0
    %913 = vmatpush1.msra.mxu0 0.0
    %914 = vmatprep.subr.mxu0 0.0
    %915 = vmatpush1.msra.mxu0 0.0
    %916 = vmatprep.subr.mxu0 0.0
    %917 = vmatpush1.msra.mxu0 0.0
    %918 = vmatprep.subr.mxu0 0.0
    %919 = vmatpush1.msra.mxu0 0.0
    %920 = vmatprep.mubr.f32.mxu0 0.0
    %921 = vmatmul.mubr.f32.gmra.mrb[0].mxu0 %v854
    %v922 = vpop.f32.mrb[0].mxu0
    %v923 = vadd.f32 0.0, %v922
    %v924 = vpop.f32.mrb[0].mxu0
    %925 = vdwg.mxu0
    %v926 = vadd.f32 %v35, %v923
    %v927 = vtanh.pop %v926
    %v929 = vsel %vm177, %v927, 0
    %931 = vmatprep.subr.mxu0 0.0
    %932 = vmatpush1.msra.mxu0 %v26
    %933 = vmatprep.subr.mxu0 0.0
    %934 = vmatpush1.msra.mxu0 %v27
    %935 = vmatprep.subr.mxu0 0.0
    %936 = vmatpush1.msra.mxu0 %v28
    %937 = vmatprep.subr.mxu0 0.0
    %938 = vmatpush1.msra.mxu0 %v29
    %939 = vmatprep.subr.mxu0 0.0
    %940 = vmatpush1.msra.mxu0 0.0
    %941 = vmatprep.subr.mxu0 0.0
    %942 = vmatpush1.msra.mxu0 0.0
    %943 = vmatprep.subr.mxu0 0.0
    %944 = vmatpush1.msra.mxu0 0.0
    %945 = vmatprep.subr.mxu0 0.0
    %946 = vmatpush1.msra.mxu0 0.0
    %947 = vmatprep.subr.mxu0 0.0
    %948 = vmatpush1.msra.mxu0 0.0
    %949 = vmatprep.subr.mxu0 0.0
    %950 = vmatpush1.msra.mxu0 0.0
    %951 = vmatprep.subr.mxu0 0.0
    %952 = vmatpush1.msra.mxu0 0.0
    %953 = vmatprep.subr.mxu0 0.0
    %954 = vmatpush1.msra.mxu0 0.0
    %955 = vmatprep.subr.mxu0 0.0
    %956 = vmatpush1.msra.mxu0 0.0
    %957 = vmatprep.subr.mxu0 0.0
    %958 = vmatpush1.msra.mxu0 0.0
    %959 = vmatprep.subr.mxu0 0.0
    %960 = vmatpush1.msra.mxu0 0.0
    %961 = vmatprep.subr.mxu0 0.0
    %962 = vmatpush1.msra.mxu0 0.0
    %963 = vmatprep.subr.mxu0 0.0
    %964 = vmatpush1.msra.mxu0 0.0
    %965 = vmatprep.subr.mxu0 0.0
    %966 = vmatpush1.msra.mxu0 0.0
    %967 = vmatprep.subr.mxu0 0.0
    %968 = vmatpush1.msra.mxu0 0.0
    %969 = vmatprep.subr.mxu0 0.0
    %970 = vmatpush1.msra.mxu0 0.0
    %971 = vmatprep.subr.mxu0 0.0
    %972 = vmatpush1.msra.mxu0 0.0
    %973 = vmatprep.subr.mxu0 0.0
    %974 = vmatpush1.msra.mxu0 0.0
    %975 = vmatprep.subr.mxu0 0.0
    %976 = vmatpush1.msra.mxu0 0.0
    %977 = vmatprep.subr.mxu0 0.0
    %978 = vmatpush1.msra.mxu0 0.0
    %979 = vmatprep.subr.mxu0 0.0
    %980 = vmatpush1.msra.mxu0 0.0
    %981 = vmatprep.subr.mxu0 0.0
    %982 = vmatpush1.msra.mxu0 0.0
    %983 = vmatprep.subr.mxu0 0.0
    %984 = vmatpush1.msra.mxu0 0.0
    %985 = vmatprep.subr.mxu0 0.0
    %986 = vmatpush1.msra.mxu0 0.0
    %987 = vmatprep.subr.mxu0 0.0
    %988 = vmatpush1.msra.mxu0 0.0
    %989 = vmatprep.subr.mxu0 0.0
    %990 = vmatpush1.msra.mxu0 0.0
    %991 = vmatprep.subr.mxu0 0.0
    %992 = vmatpush1.msra.mxu0 0.0
    %993 = vmatprep.subr.mxu0 0.0
    %994 = vmatpush1.msra.mxu0 0.0
    %995 = vmatprep.mubr.f32.mxu0 0.0
    %996 = vmatmul.mubr.f32.gmra.mrb[0].mxu0 %v929
    %v997 = vpop.f32.mrb[0].mxu0
    %v998 = vadd.f32 0.0, %v997
    %v999 = vpop.f32.mrb[0].mxu0
    %1000 = vdwg.mxu0
    %v1001 = vadd.f32 %v35, %v998
    %v1002 = vtanh.pop %v1001
    %v1003 = vld [vmem:[%s5] sm:$0xff]
    %v1004 = vld [vmem:[%s5 + $0x8] sm:$0xff]
    %v1005 = vld [vmem:[%s5 + $0x10] sm:$0xff]
    %v1006 = vld [vmem:[%s5 + $0x18] sm:$0xff]
    %v1007 = vld [vmem:[%s4] sm:$0x1]
    %v1009 = vlaneseq
    %v1010 = vshrl.u32 %v1009, 7
    %v1011 = vsub.s32 0, %v1010
    %v1012 = vrot.slane %v1007, %v1011
    %v1015 = vsel %vm177, %v1002, 0
    %1017 = vmatprep.subr.mxu0 0.0
    %1018 = vmatpush1.msra.mxu0 %v1003
    %1019 = vmatprep.subr.mxu0 0.0
    %1020 = vmatpush1.msra.mxu0 %v1004
    %1021 = vmatprep.subr.mxu0 0.0
    %1022 = vmatpush1.msra.mxu0 %v1005
    %1023 = vmatprep.subr.mxu0 0.0
    %1024 = vmatpush1.msra.mxu0 %v1006
    %1025 = vmatprep.subr.mxu0 0.0
    %1026 = vmatpush1.msra.mxu0 0.0
    %1027 = vmatprep.subr.mxu0 0.0
    %1028 = vmatpush1.msra.mxu0 0.0
    %1029 = vmatprep.subr.mxu0 0.0
    %1030 = vmatpush1.msra.mxu0 0.0
    %1031 = vmatprep.subr.mxu0 0.0
    %1032 = vmatpush1.msra.mxu0 0.0
    %1033 = vmatprep.subr.mxu0 0.0
    %1034 = vmatpush1.msra.mxu0 0.0
    %1035 = vmatprep.subr.mxu0 0.0
    %1036 = vmatpush1.msra.mxu0 0.0
    %1037 = vmatprep.subr.mxu0 0.0
    %1038 = vmatpush1.msra.mxu0 0.0
    %1039 = vmatprep.subr.mxu0 0.0
    %1040 = vmatpush1.msra.mxu0 0.0
    %1041 = vmatprep.subr.mxu0 0.0
    %1042 = vmatpush1.msra.mxu0 0.0
    %1043 = vmatprep.subr.mxu0 0.0
    %1044 = vmatpush1.msra.mxu0 0.0
    %1045 = vmatprep.subr.mxu0 0.0
    %1046 = vmatpush1.msra.mxu0 0.0
    %1047 = vmatprep.subr.mxu0 0.0
    %1048 = vmatpush1.msra.mxu0 0.0
    %1049 = vmatprep.subr.mxu0 0.0
    %1050 = vmatpush1.msra.mxu0 0.0
    %1051 = vmatprep.subr.mxu0 0.0
    %1052 = vmatpush1.msra.mxu0 0.0
    %1053 = vmatprep.subr.mxu0 0.0
    %1054 = vmatpush1.msra.mxu0 0.0
    %1055 = vmatprep.subr.mxu0 0.0
    %1056 = vmatpush1.msra.mxu0 0.0
    %1057 = vmatprep.subr.mxu0 0.0
    %1058 = vmatpush1.msra.mxu0 0.0
    %1059 = vmatprep.subr.mxu0 0.0
    %1060 = vmatpush1.msra.mxu0 0.0
    %1061 = vmatprep.subr.mxu0 0.0
    %1062 = vmatpush1.msra.mxu0 0.0
    %1063 = vmatprep.subr.mxu0 0.0
    %1064 = vmatpush1.msra.mxu0 0.0
    %1065 = vmatprep.subr.mxu0 0.0
    %1066 = vmatpush1.msra.mxu0 0.0
    %1067 = vmatprep.subr.mxu0 0.0
    %1068 = vmatpush1.msra.mxu0 0.0
    %1069 = vmatprep.subr.mxu0 0.0
    %1070 = vmatpush1.msra.mxu0 0.0
    %1071 = vmatprep.subr.mxu0 0.0
    %1072 = vmatpush1.msra.mxu0 0.0
    %1073 = vmatprep.subr.mxu0 0.0
    %1074 = vmatpush1.msra.mxu0 0.0
    %1075 = vmatprep.subr.mxu0 0.0
    %1076 = vmatpush1.msra.mxu0 0.0
    %1077 = vmatprep.subr.mxu0 0.0
    %1078 = vmatpush1.msra.mxu0 0.0
    %1079 = vmatprep.subr.mxu0 0.0
    %1080 = vmatpush1.msra.mxu0 0.0
    %1081 = vmatprep.mubr.f32.mxu0 0.0
    %1082 = vmatmul.mubr.f32.gmra.mrb[0].mxu0 %v779
    %v1083 = vpop.f32.mrb[0].mxu0
    %v1084 = vadd.f32 %v1012, %v1083
    %v1085 = vpop.f32.mrb[0].mxu0
    %1086 = vmatprep.mubr.f32.mxu0 0.0
    %1087 = vmatmul.mubr.f32.gmra.mrb[0].mxu0 %v854
    %v1088 = vpop.f32.mrb[0].mxu0
    %v1089 = vadd.f32 %v1012, %v1088
    %v1090 = vpop.f32.mrb[0].mxu0
    %1091 = vmatprep.mubr.f32.mxu0 0.0
    %1092 = vmatmul.mubr.f32.gmra.mrb[0].mxu0 %v929
    %v1093 = vpop.f32.mrb[0].mxu0
    %v1094 = vadd.f32 %v1012, %v1093
    %v1095 = vpop.f32.mrb[0].mxu0
    %1096 = vmatprep.mubr.f32.mxu0 0.0
    %1097 = vmatmul.mubr.f32.gmra.mrb[0].mxu0 %v1015
    %v1098 = vpop.f32.mrb[0].mxu0
    %v1099 = vadd.f32 %v1012, %v1098
    %v1100 = vpop.f32.mrb[0].mxu0
    %1101 = vdwg.mxu0
    %v1102 = vmax.f32 %v1084, 0.0
    %v1103 = vmax.f32 %v1089, 0.0
    %v1104 = vmax.f32 %v1094, 0.0
    %v1105 = vmax.f32 %v1099, 0.0
    %1106 = vst.msk [vmem:[%s6] sm:$0xff] %vm47, %v1102
    %1107 = vst.msk [vmem:[%s6 + $0x8] sm:$0xff] %vm47, %v1103
    %1108 = vst.msk [vmem:[%s6 + $0x10] sm:$0xff] %vm47, %v1104
    %1109 = vst.msk [vmem:[%s6 + $0x18] sm:$0xff] %vm47, %v1105
    %1110 = vst.msk [vmem:[#allocation2] sm:$0xff] %vm177, %v1002
    // Predicated region
    $region26: #{tpu_custom_call.1} parent=1 // pred_check
      _
    $region27: #{tpu_custom_call.1} parent=1 // pred_check_branch
      %1112 = sbr.rel (0) target = $region29
    $region28: #{tpu_custom_call.1} parent=1 // pred_region
      _
    $region29: #{tpu_custom_call.1} parent=1 // pred_fallthru
      _
    // Predicated region
    $region30: #{tpu_custom_call.1} parent=1 // pred_check
      _
    $region31: #{tpu_custom_call.1} parent=1 // pred_check_branch
      %1114 = sbr.rel (0) target = $region33
    $region32: #{tpu_custom_call.1} parent=1 // pred_region
      %s1116 = ssub.s32 128, 128
      %1117 = vsyncadd [#allocation3], %s1116
      %s1119 = sshll.u32 [#allocation2], 4
      %s1120 = int_to_ptr.vmem [resolvable:$true] %s1119
      %1122 = dma.vmem_to_hbm [thread:$0]  %s1120, 128, %s7, [#allocation3]
    $region33: #{tpu_custom_call.1} parent=1 // pred_fallthru
      _
    // Predicated region
    $region34: #{tpu_custom_call.1} parent=1 // pred_check
      _
    $region35: #{tpu_custom_call.1} parent=1 // pred_check_branch
      %1124 = sbr.rel (0) target = $region37
    $region36: #{tpu_custom_call.1} parent=1 // pred_region
      _
    $region37: #{tpu_custom_call.1} parent=1 // pred_fallthru
      _
    // Predicated region
    $region38: #{tpu_custom_call.1} parent=1 // pred_check
      _
    $region39: #{tpu_custom_call.1} parent=1 // pred_check_branch
      %1126 = sbr.rel (0) target = $region41
    $region40: #{tpu_custom_call.1} parent=1 // pred_region
      %1127 = dma.done [#allocation3], 128
    $region41: #{tpu_custom_call.1} parent=1 // pred_fallthru
      _
    %1128 = vsyncpa [#allocation3], 1

</llo_original>
